<compile_context>
chip_gen: v5e
topology: v5e:2x2
jax: 0.10.0
libtpu: 0.0.40
codegen_flags: <defaults>
</compile_context>

<pallas_src>
import jax
import jax.numpy as jnp
from jax import lax
from jax.experimental import pallas as pl
from jax.experimental.pallas import tpu as pltpu


def rnn_kernel(x_ref, h0_ref, wih_ref, whh_ref, brnn_ref, wfc_ref, bfc_ref,
               out_ref, hn_ref, hs_scr):
    """Fused RNN + FC + log-softmax for one batch chunk.

    x_ref:   (S, Bt, I)   time-major input chunk
    h0_ref:  (Bt, H)      initial hidden state chunk
    wih_ref: (I, H)       W_ih^T
    whh_ref: (H, H)       W_hh^T
    brnn_ref:(1, H)       b_ih + b_hh
    wfc_ref: (H, Op)      W_fc^T zero-padded to 128 output lanes
    bfc_ref: (1, Op)      b_fc padded with -1e30 (padded cols vanish in softmax)
    out_ref: (S, Bt, Op)  log-softmax output (lane-dense single writeback)
    hn_ref:  (Bt, H)      final hidden state chunk
    hs_scr:  (S, Bt, H)   merged VMEM scratch: input projection, then h_t
    """
    S, Bt, H = hs_scr.shape
    I = x_ref.shape[-1]
    Op = out_ref.shape[-1]

    # ---- Prologue: hoist the non-recurrent input projection out of the loop.
    # One (S*Bt, I) x (I, H) MXU matmul (fused b_ih + b_hh), stored into the
    # merged scratch.
    xp = (jnp.dot(x_ref[...].reshape(S * Bt, I), wih_ref[...],
                  preferred_element_type=jnp.float32)
          + brnn_ref[...])
    hs_scr[...] = xp.reshape(S, Bt, H)

    # ---- Recurrence: only h_{t-1} @ W_hh^T + tanh on the serial path.
    whh = whh_ref[...]                       # hoist weight load out of the loop

    def step(t, h):
        # Read the hoisted projection for step t, then overwrite the same
        # slice with h_t (read lands in vregs before the store).
        h_new = jnp.tanh(hs_scr[t]
                         + jnp.dot(h, whh, preferred_element_type=jnp.float32))
        hs_scr[t] = h_new
        return h_new

    h_last = lax.fori_loop(0, S, step, h0_ref[...], unroll=min(S, 8))
    hn_ref[...] = h_last                     # written exactly once

    # ---- Epilogue: one FC matmul + vectorized stable log-softmax, one store.
    logits = (jnp.dot(hs_scr[...].reshape(S * Bt, H), wfc_ref[...],
                      preferred_element_type=jnp.float32)
              + bfc_ref[...])                                    # (S*Bt, Op)
    m = jnp.max(logits, axis=-1, keepdims=True)
    shifted = logits - m
    lse = jnp.log(jnp.sum(jnp.exp(shifted), axis=-1, keepdims=True))
    out_ref[...] = (shifted - lse).reshape(S, Bt, Op)


def rnn_forward(x, h0, params):
    """x: (B, S, I) f32, h0: (1, B, H) f32 -> (out (B, S, O), hn (1, B, H))."""
    B, S, I = x.shape
    H = params["w_hh"].shape[0]
    O = params["w_fc"].shape[0]
    Op = max(128, -(-O // 128) * 128)        # lane-dense padded FC width

    # Pad batch to a multiple of 8 sublanes; padded rows are zeros, computed
    # harmlessly and sliced away after the kernel.
    Bp = max(8, -(-B // 8) * 8)
    # Split batch into chunks: >=2 chunks (when divisible) feeds both v7x
    # TensorCores via the parallel grid axis; neutral on v5e/v6e.
    nb = 2 if (Bp >= 16 and Bp % 16 == 0) else 1
    Bt = Bp // nb

    x_p = jnp.pad(x, ((0, Bp - B), (0, 0), (0, 0)))              # (Bp, S, I)
    x_tm = jnp.transpose(x_p, (1, 0, 2))                         # (S, Bp, I)
    h0_p = jnp.pad(h0[0], ((0, Bp - B), (0, 0)))                 # (Bp, H)

    wih_t = params["w_ih"].T                                     # (I, H)
    whh_t = params["w_hh"].T                                     # (H, H)
    b_rnn = (params["b_ih"] + params["b_hh"]).reshape(1, H)
    # Lane-dense FC output: zero-pad weight columns; padded bias is a large
    # negative so those logits contribute exp(...)=0 to the softmax denom.
    wfc_t = jnp.pad(params["w_fc"].T, ((0, 0), (0, Op - O)))     # (H, Op)
    b_fc = jnp.pad(params["b_fc"], (0, Op - O),
                   constant_values=-1e30).reshape(1, Op)

    # VMEM budget: double-buffered in/out blocks + weights + merged scratch,
    # with 2x headroom; clamped so it stays safe on v7x (64 MiB physical).
    per_step_elems = (S * Bt * I + Bt * H            # x block, h0 block
                      + I * H + H * H + H            # rnn weights + bias
                      + H * Op + Op                  # fc weights + bias
                      + S * Bt * Op + Bt * H)        # out block, hn block
    resident_bytes = 4 * (2 * per_step_elems + S * Bt * H)
    vmem_limit = int(min(48 * 1024 * 1024,
                         max(32 * 1024 * 1024, 2 * resident_bytes)))

    out_pad, hn_pad = pl.pallas_call(
        rnn_kernel,
        out_shape=(jax.ShapeDtypeStruct((S, Bp, Op), jnp.float32),
                   jax.ShapeDtypeStruct((Bp, H), jnp.float32)),
        grid_spec=pltpu.PrefetchScalarGridSpec(
            num_scalar_prefetch=0,
            grid=(nb,),
            in_specs=[
                pl.BlockSpec((S, Bt, I), lambda b: (0, b, 0)),   # x (batch-tiled)
                pl.BlockSpec((Bt, H), lambda b: (b, 0)),         # h0
                pl.BlockSpec((I, H), lambda b: (0, 0)),          # W_ih^T
                pl.BlockSpec((H, H), lambda b: (0, 0)),          # W_hh^T
                pl.BlockSpec((1, H), lambda b: (0, 0)),          # b_ih + b_hh
                pl.BlockSpec((H, Op), lambda b: (0, 0)),         # W_fc^T (padded)
                pl.BlockSpec((1, Op), lambda b: (0, 0)),         # b_fc (padded)
            ],
            out_specs=(pl.BlockSpec((S, Bt, Op), lambda b: (0, b, 0)),
                       pl.BlockSpec((Bt, H), lambda b: (b, 0))),
            scratch_shapes=[pltpu.VMEM((S, Bt, H), jnp.float32)],  # merged scratch
        ),
        compiler_params=pltpu.CompilerParams(
            dimension_semantics=("parallel",),
            vmem_limit_bytes=vmem_limit),
    )(x_tm, h0_p, wih_t, whh_t, b_rnn, wfc_t, b_fc)

    out = jnp.transpose(out_pad, (1, 0, 2))[:B, :, :O]           # (B, S, O)
    hn = hn_pad[:B][None]                                        # (1, B, H)
    return out, hn


def reference_forward(x, h0, params):
    """Pure-JAX reference matching torch nn.RNN(batch_first=True) + Linear + LogSoftmax."""
    def step(h, x_t):
        h_new = jnp.tanh(x_t @ params["w_ih"].T + params["b_ih"]
                         + h @ params["w_hh"].T + params["b_hh"])
        return h_new, h_new
    hn, hs = lax.scan(step, h0[0], jnp.transpose(x, (1, 0, 2)))
    out = jnp.transpose(hs, (1, 0, 2))                           # (B, S, H)
    logits = out @ params["w_fc"].T + params["b_fc"]             # (B, S, O)
    logp = jax.nn.log_softmax(logits, axis=2)
    return logp, hn[None]


def init_params(key, input_size, hidden_size, output_size):
    ks = jax.random.split(key, 6)
    bound_rnn = 1.0 / jnp.sqrt(hidden_size)
    bound_fc = 1.0 / jnp.sqrt(hidden_size)
    u = lambda k, shape, b: jax.random.uniform(k, shape, jnp.float32, -b, b)
    return {
        "w_ih": u(ks[0], (hidden_size, input_size), bound_rnn),
        "w_hh": u(ks[1], (hidden_size, hidden_size), bound_rnn),
        "b_ih": u(ks[2], (hidden_size,), bound_rnn),
        "b_hh": u(ks[3], (hidden_size,), bound_rnn),
        "w_fc": u(ks[4], (output_size, hidden_size), bound_fc),
        "b_fc": u(ks[5], (output_size,), bound_fc),
    }


if __name__ == "__main__":
    B, S, I, H, O = 4, 8, 16, 32, 16

    key = jax.random.PRNGKey(0)
    k_params, k_x = jax.random.split(key)
    params = init_params(k_params, I, H, O)
    x = jax.random.normal(k_x, (B, S, I), jnp.float32)
    h0 = jnp.zeros((1, B, H), jnp.float32)   # RNN.initHidden equivalent

    out, hn = jax.jit(rnn_forward)(x, h0, params)
    jax.block_until_ready((out, hn))

    out_ref, hn_ref = reference_forward(x, h0, params)
    assert out.shape == (B, S, O) and hn.shape == (1, B, H)
    assert jnp.allclose(out, out_ref, atol=1e-5, rtol=1e-5)
    assert jnp.allclose(hn, hn_ref, atol=1e-5, rtol=1e-5)

    print("KERNEL_OK")
</pallas_src>

<mosaic_0001>
module attributes {stable_mosaic.version = 11 : i64} {
  func.func @rnn_kernel(%arg0: i32, %arg1: memref<8x8x16xf32, #tpu.memory_space<vmem>>, %arg2: memref<8x32xf32, #tpu.memory_space<vmem>>, %arg3: memref<16x32xf32, #tpu.memory_space<vmem>>, %arg4: memref<32x32xf32, #tpu.memory_space<vmem>>, %arg5: memref<1x32xf32, #tpu.memory_space<vmem>>, %arg6: memref<32x128xf32, #tpu.memory_space<vmem>>, %arg7: memref<1x128xf32, #tpu.memory_space<vmem>>, %arg8: memref<8x8x128xf32, #tpu.memory_space<vmem>>, %arg9: memref<8x32xf32, #tpu.memory_space<vmem>>, %arg10: memref<8x8x32xf32, #tpu.memory_space<vmem>>) attributes {dimension_semantics = [#tpu.dimension_semantics<parallel>], iteration_bounds = array<i64: 1>, scalar_prefetch = 0 : i64, scratch_operands = 1 : i64, tpu.core_type = #tpu.core_type<tc>, window_params = [{transform_indices = @transform_0, window_bounds = array<i64: 8, 8, 16>}, {transform_indices = @transform_1, window_bounds = array<i64: 8, 32>}, {pipeline_mode = #tpu.pipeline_mode<synchronous>, transform_indices = @transform_2, window_bounds = array<i64: 16, 32>}, {pipeline_mode = #tpu.pipeline_mode<synchronous>, transform_indices = @transform_3, window_bounds = array<i64: 32, 32>}, {pipeline_mode = #tpu.pipeline_mode<synchronous>, transform_indices = @transform_4, window_bounds = array<i64: 1, 32>}, {pipeline_mode = #tpu.pipeline_mode<synchronous>, transform_indices = @transform_5, window_bounds = array<i64: 32, 128>}, {pipeline_mode = #tpu.pipeline_mode<synchronous>, transform_indices = @transform_6, window_bounds = array<i64: 1, 128>}, {transform_indices = @transform_7, window_bounds = array<i64: 8, 8, 128>}, {transform_indices = @transform_8, window_bounds = array<i64: 8, 32>}]} {
    %c0 = arith.constant 0 : index
    %c0_0 = arith.constant 0 : index
    %c0_1 = arith.constant 0 : index
    %0 = vector.load %arg1[%c0, %c0_0, %c0_1] : memref<8x8x16xf32, #tpu.memory_space<vmem>>, vector<8x8x16xf32>
    %1 = vector.shape_cast %0 : vector<8x8x16xf32> to vector<64x16xf32>
    %c0_2 = arith.constant 0 : index
    %c0_3 = arith.constant 0 : index
    %2 = vector.load %arg3[%c0_2, %c0_3] : memref<16x32xf32, #tpu.memory_space<vmem>>, vector<16x32xf32>
    %cst = arith.constant dense<0.000000e+00> : vector<64x32xf32>
    %3 = tpu.matmul %1, %2, %cst {dimension_numbers = #tpu.dot_dimension_numbers<[1], [0], [0], [1], [0, 0, 1, 1], [], []>} : vector<64x16xf32>, vector<16x32xf32>, vector<64x32xf32> -> vector<64x32xf32>
    %c0_4 = arith.constant 0 : index
    %c0_5 = arith.constant 0 : index
    %4 = vector.load %arg5[%c0_4, %c0_5] : memref<1x32xf32, #tpu.memory_space<vmem>>, vector<1x32xf32>
    %5 = vector.broadcast %4 : vector<1x32xf32> to vector<64x32xf32>
    %6 = arith.addf %3, %5 : vector<64x32xf32>
    %7 = vector.shape_cast %6 : vector<64x32xf32> to vector<8x8x32xf32>
    %c0_6 = arith.constant 0 : index
    %c0_7 = arith.constant 0 : index
    %c0_8 = arith.constant 0 : index
    %8 = vector.load %arg10[%c0_6, %c0_7, %c0_8] : memref<8x8x32xf32, #tpu.memory_space<vmem>>, vector<8x8x32xf32>
    tpu.vector_store %arg10[%c0_6, %c0_7, %c0_8], %7 {strides = array<i32>} : memref<8x8x32xf32, #tpu.memory_space<vmem>>, vector<8x8x32xf32>,
    %c0_9 = arith.constant 0 : index
    %c0_10 = arith.constant 0 : index
    %9 = vector.load %arg4[%c0_9, %c0_10] : memref<32x32xf32, #tpu.memory_space<vmem>>, vector<32x32xf32>
    %c0_11 = arith.constant 0 : index
    %c0_12 = arith.constant 0 : index
    %10 = vector.load %arg2[%c0_11, %c0_12] : memref<8x32xf32, #tpu.memory_space<vmem>>, vector<8x32xf32>
    %c0_i32 = arith.constant 0 : i32
    %11 = arith.index_cast %c0_i32 : i32 to index
    %c0_13 = arith.constant 0 : index
    %c0_14 = arith.constant 0 : index
    %12 = vector.load %arg10[%11, %c0_13, %c0_14] : memref<8x8x32xf32, #tpu.memory_space<vmem>>, vector<1x8x32xf32>
    %13 = vector.shape_cast %12 : vector<1x8x32xf32> to vector<8x32xf32>
    %cst_15 = arith.constant dense<0.000000e+00> : vector<8x32xf32>
    %14 = tpu.matmul %10, %9, %cst_15 {dimension_numbers = #tpu.dot_dimension_numbers<[1], [0], [0], [1], [0, 0, 1, 1], [], []>} : vector<8x32xf32>, vector<32x32xf32>, vector<8x32xf32> -> vector<8x32xf32>
    %15 = arith.addf %13, %14 : vector<8x32xf32>
    %16 = math.tanh %15 : vector<8x32xf32>
    %17 = arith.index_cast %c0_i32 : i32 to index
    %c0_16 = arith.constant 0 : index
    %c0_17 = arith.constant 0 : index
    %18 = vector.load %arg10[%17, %c0_16, %c0_17] : memref<8x8x32xf32, #tpu.memory_space<vmem>>, vector<1x8x32xf32>
    %19 = vector.shape_cast %18 : vector<1x8x32xf32> to vector<8x32xf32>
    %20 = vector.shape_cast %16 : vector<8x32xf32> to vector<1x8x32xf32>
    tpu.vector_store %arg10[%17, %c0_16, %c0_17], %20 {strides = array<i32>} : memref<8x8x32xf32, #tpu.memory_space<vmem>>, vector<1x8x32xf32>,
    %c1_i32 = arith.constant 1 : i32
    %21 = arith.index_cast %c1_i32 : i32 to index
    %c0_18 = arith.constant 0 : index
    %c0_19 = arith.constant 0 : index
    %22 = vector.load %arg10[%21, %c0_18, %c0_19] : memref<8x8x32xf32, #tpu.memory_space<vmem>>, vector<1x8x32xf32>
    %23 = vector.shape_cast %22 : vector<1x8x32xf32> to vector<8x32xf32>
    %cst_20 = arith.constant dense<0.000000e+00> : vector<8x32xf32>
    %24 = tpu.matmul %16, %9, %cst_20 {dimension_numbers = #tpu.dot_dimension_numbers<[1], [0], [0], [1], [0, 0, 1, 1], [], []>} : vector<8x32xf32>, vector<32x32xf32>, vector<8x32xf32> -> vector<8x32xf32>
    %25 = arith.addf %23, %24 : vector<8x32xf32>
    %26 = math.tanh %25 : vector<8x32xf32>
    %27 = arith.index_cast %c1_i32 : i32 to index
    %c0_21 = arith.constant 0 : index
    %c0_22 = arith.constant 0 : index
    %28 = vector.load %arg10[%27, %c0_21, %c0_22] : memref<8x8x32xf32, #tpu.memory_space<vmem>>, vector<1x8x32xf32>
    %29 = vector.shape_cast %28 : vector<1x8x32xf32> to vector<8x32xf32>
    %30 = vector.shape_cast %26 : vector<8x32xf32> to vector<1x8x32xf32>
    tpu.vector_store %arg10[%27, %c0_21, %c0_22], %30 {strides = array<i32>} : memref<8x8x32xf32, #tpu.memory_space<vmem>>, vector<1x8x32xf32>,
    %c2_i32 = arith.constant 2 : i32
    %31 = arith.index_cast %c2_i32 : i32 to index
    %c0_23 = arith.constant 0 : index
    %c0_24 = arith.constant 0 : index
    %32 = vector.load %arg10[%31, %c0_23, %c0_24] : memref<8x8x32xf32, #tpu.memory_space<vmem>>, vector<1x8x32xf32>
    %33 = vector.shape_cast %32 : vector<1x8x32xf32> to vector<8x32xf32>
    %cst_25 = arith.constant dense<0.000000e+00> : vector<8x32xf32>
    %34 = tpu.matmul %26, %9, %cst_25 {dimension_numbers = #tpu.dot_dimension_numbers<[1], [0], [0], [1], [0, 0, 1, 1], [], []>} : vector<8x32xf32>, vector<32x32xf32>, vector<8x32xf32> -> vector<8x32xf32>
    %35 = arith.addf %33, %34 : vector<8x32xf32>
    %36 = math.tanh %35 : vector<8x32xf32>
    %37 = arith.index_cast %c2_i32 : i32 to index
    %c0_26 = arith.constant 0 : index
    %c0_27 = arith.constant 0 : index
    %38 = vector.load %arg10[%37, %c0_26, %c0_27] : memref<8x8x32xf32, #tpu.memory_space<vmem>>, vector<1x8x32xf32>
    %39 = vector.shape_cast %38 : vector<1x8x32xf32> to vector<8x32xf32>
    %40 = vector.shape_cast %36 : vector<8x32xf32> to vector<1x8x32xf32>
    tpu.vector_store %arg10[%37, %c0_26, %c0_27], %40 {strides = array<i32>} : memref<8x8x32xf32, #tpu.memory_space<vmem>>, vector<1x8x32xf32>,
    %c3_i32 = arith.constant 3 : i32
    %41 = arith.index_cast %c3_i32 : i32 to index
    %c0_28 = arith.constant 0 : index
    %c0_29 = arith.constant 0 : index
    %42 = vector.load %arg10[%41, %c0_28, %c0_29] : memref<8x8x32xf32, #tpu.memory_space<vmem>>, vector<1x8x32xf32>
    %43 = vector.shape_cast %42 : vector<1x8x32xf32> to vector<8x32xf32>
    %cst_30 = arith.constant dense<0.000000e+00> : vector<8x32xf32>
    %44 = tpu.matmul %36, %9, %cst_30 {dimension_numbers = #tpu.dot_dimension_numbers<[1], [0], [0], [1], [0, 0, 1, 1], [], []>} : vector<8x32xf32>, vector<32x32xf32>, vector<8x32xf32> -> vector<8x32xf32>
    %45 = arith.addf %43, %44 : vector<8x32xf32>
    %46 = math.tanh %45 : vector<8x32xf32>
    %47 = arith.index_cast %c3_i32 : i32 to index
    %c0_31 = arith.constant 0 : index
    %c0_32 = arith.constant 0 : index
    %48 = vector.load %arg10[%47, %c0_31, %c0_32] : memref<8x8x32xf32, #tpu.memory_space<vmem>>, vector<1x8x32xf32>
    %49 = vector.shape_cast %48 : vector<1x8x32xf32> to vector<8x32xf32>
    %50 = vector.shape_cast %46 : vector<8x32xf32> to vector<1x8x32xf32>
    tpu.vector_store %arg10[%47, %c0_31, %c0_32], %50 {strides = array<i32>} : memref<8x8x32xf32, #tpu.memory_space<vmem>>, vector<1x8x32xf32>,
    %c4_i32 = arith.constant 4 : i32
    %51 = arith.index_cast %c4_i32 : i32 to index
    %c0_33 = arith.constant 0 : index
    %c0_34 = arith.constant 0 : index
    %52 = vector.load %arg10[%51, %c0_33, %c0_34] : memref<8x8x32xf32, #tpu.memory_space<vmem>>, vector<1x8x32xf32>
    %53 = vector.shape_cast %52 : vector<1x8x32xf32> to vector<8x32xf32>
    %cst_35 = arith.constant dense<0.000000e+00> : vector<8x32xf32>
    %54 = tpu.matmul %46, %9, %cst_35 {dimension_numbers = #tpu.dot_dimension_numbers<[1], [0], [0], [1], [0, 0, 1, 1], [], []>} : vector<8x32xf32>, vector<32x32xf32>, vector<8x32xf32> -> vector<8x32xf32>
    %55 = arith.addf %53, %54 : vector<8x32xf32>
    %56 = math.tanh %55 : vector<8x32xf32>
    %57 = arith.index_cast %c4_i32 : i32 to index
    %c0_36 = arith.constant 0 : index
    %c0_37 = arith.constant 0 : index
    %58 = vector.load %arg10[%57, %c0_36, %c0_37] : memref<8x8x32xf32, #tpu.memory_space<vmem>>, vector<1x8x32xf32>
    %59 = vector.shape_cast %58 : vector<1x8x32xf32> to vector<8x32xf32>
    %60 = vector.shape_cast %56 : vector<8x32xf32> to vector<1x8x32xf32>
    tpu.vector_store %arg10[%57, %c0_36, %c0_37], %60 {strides = array<i32>} : memref<8x8x32xf32, #tpu.memory_space<vmem>>, vector<1x8x32xf32>,
    %c5_i32 = arith.constant 5 : i32
    %61 = arith.index_cast %c5_i32 : i32 to index
    %c0_38 = arith.constant 0 : index
    %c0_39 = arith.constant 0 : index
    %62 = vector.load %arg10[%61, %c0_38, %c0_39] : memref<8x8x32xf32, #tpu.memory_space<vmem>>, vector<1x8x32xf32>
    %63 = vector.shape_cast %62 : vector<1x8x32xf32> to vector<8x32xf32>
    %cst_40 = arith.constant dense<0.000000e+00> : vector<8x32xf32>
    %64 = tpu.matmul %56, %9, %cst_40 {dimension_numbers = #tpu.dot_dimension_numbers<[1], [0], [0], [1], [0, 0, 1, 1], [], []>} : vector<8x32xf32>, vector<32x32xf32>, vector<8x32xf32> -> vector<8x32xf32>
    %65 = arith.addf %63, %64 : vector<8x32xf32>
    %66 = math.tanh %65 : vector<8x32xf32>
    %67 = arith.index_cast %c5_i32 : i32 to index
    %c0_41 = arith.constant 0 : index
    %c0_42 = arith.constant 0 : index
    %68 = vector.load %arg10[%67, %c0_41, %c0_42] : memref<8x8x32xf32, #tpu.memory_space<vmem>>, vector<1x8x32xf32>
    %69 = vector.shape_cast %68 : vector<1x8x32xf32> to vector<8x32xf32>
    %70 = vector.shape_cast %66 : vector<8x32xf32> to vector<1x8x32xf32>
    tpu.vector_store %arg10[%67, %c0_41, %c0_42], %70 {strides = array<i32>} : memref<8x8x32xf32, #tpu.memory_space<vmem>>, vector<1x8x32xf32>,
    %c6_i32 = arith.constant 6 : i32
    %71 = arith.index_cast %c6_i32 : i32 to index
    %c0_43 = arith.constant 0 : index
    %c0_44 = arith.constant 0 : index
    %72 = vector.load %arg10[%71, %c0_43, %c0_44] : memref<8x8x32xf32, #tpu.memory_space<vmem>>, vector<1x8x32xf32>
    %73 = vector.shape_cast %72 : vector<1x8x32xf32> to vector<8x32xf32>
    %cst_45 = arith.constant dense<0.000000e+00> : vector<8x32xf32>
    %74 = tpu.matmul %66, %9, %cst_45 {dimension_numbers = #tpu.dot_dimension_numbers<[1], [0], [0], [1], [0, 0, 1, 1], [], []>} : vector<8x32xf32>, vector<32x32xf32>, vector<8x32xf32> -> vector<8x32xf32>
    %75 = arith.addf %73, %74 : vector<8x32xf32>
    %76 = math.tanh %75 : vector<8x32xf32>
    %77 = arith.index_cast %c6_i32 : i32 to index
    %c0_46 = arith.constant 0 : index
    %c0_47 = arith.constant 0 : index
    %78 = vector.load %arg10[%77, %c0_46, %c0_47] : memref<8x8x32xf32, #tpu.memory_space<vmem>>, vector<1x8x32xf32>
    %79 = vector.shape_cast %78 : vector<1x8x32xf32> to vector<8x32xf32>
    %80 = vector.shape_cast %76 : vector<8x32xf32> to vector<1x8x32xf32>
    tpu.vector_store %arg10[%77, %c0_46, %c0_47], %80 {strides = array<i32>} : memref<8x8x32xf32, #tpu.memory_space<vmem>>, vector<1x8x32xf32>,
    %c7_i32 = arith.constant 7 : i32
    %81 = arith.index_cast %c7_i32 : i32 to index
    %c0_48 = arith.constant 0 : index
    %c0_49 = arith.constant 0 : index
    %82 = vector.load %arg10[%81, %c0_48, %c0_49] : memref<8x8x32xf32, #tpu.memory_space<vmem>>, vector<1x8x32xf32>
    %83 = vector.shape_cast %82 : vector<1x8x32xf32> to vector<8x32xf32>
    %cst_50 = arith.constant dense<0.000000e+00> : vector<8x32xf32>
    %84 = tpu.matmul %76, %9, %cst_50 {dimension_numbers = #tpu.dot_dimension_numbers<[1], [0], [0], [1], [0, 0, 1, 1], [], []>} : vector<8x32xf32>, vector<32x32xf32>, vector<8x32xf32> -> vector<8x32xf32>
    %85 = arith.addf %83, %84 : vector<8x32xf32>
    %86 = math.tanh %85 : vector<8x32xf32>
    %87 = arith.index_cast %c7_i32 : i32 to index
    %c0_51 = arith.constant 0 : index
    %c0_52 = arith.constant 0 : index
    %88 = vector.load %arg10[%87, %c0_51, %c0_52] : memref<8x8x32xf32, #tpu.memory_space<vmem>>, vector<1x8x32xf32>
    %89 = vector.shape_cast %88 : vector<1x8x32xf32> to vector<8x32xf32>
    %90 = vector.shape_cast %86 : vector<8x32xf32> to vector<1x8x32xf32>
    tpu.vector_store %arg10[%87, %c0_51, %c0_52], %90 {strides = array<i32>} : memref<8x8x32xf32, #tpu.memory_space<vmem>>, vector<1x8x32xf32>,
    %c8_i32 = arith.constant 8 : i32
    %c0_53 = arith.constant 0 : index
    %c0_54 = arith.constant 0 : index
    %91 = vector.load %arg9[%c0_53, %c0_54] : memref<8x32xf32, #tpu.memory_space<vmem>>, vector<8x32xf32>
    tpu.vector_store %arg9[%c0_53, %c0_54], %86 {strides = array<i32>} : memref<8x32xf32, #tpu.memory_space<vmem>>, vector<8x32xf32>,
    %c0_55 = arith.constant 0 : index
    %c0_56 = arith.constant 0 : index
    %c0_57 = arith.constant 0 : index
    %92 = vector.load %arg10[%c0_55, %c0_56, %c0_57] : memref<8x8x32xf32, #tpu.memory_space<vmem>>, vector<8x8x32xf32>
    %93 = vector.shape_cast %92 : vector<8x8x32xf32> to vector<64x32xf32>
    %c0_58 = arith.constant 0 : index
    %c0_59 = arith.constant 0 : index
    %94 = vector.load %arg6[%c0_58, %c0_59] : memref<32x128xf32, #tpu.memory_space<vmem>>, vector<32x128xf32>
    %cst_60 = arith.constant dense<0.000000e+00> : vector<64x128xf32>
    %95 = tpu.matmul %93, %94, %cst_60 {dimension_numbers = #tpu.dot_dimension_numbers<[1], [0], [0], [1], [0, 0, 1, 1], [], []>} : vector<64x32xf32>, vector<32x128xf32>, vector<64x128xf32> -> vector<64x128xf32>
    %c0_61 = arith.constant 0 : index
    %c0_62 = arith.constant 0 : index
    %96 = vector.load %arg7[%c0_61, %c0_62] : memref<1x128xf32, #tpu.memory_space<vmem>>, vector<1x128xf32>
    %97 = vector.broadcast %96 : vector<1x128xf32> to vector<64x128xf32>
    %98 = arith.addf %95, %97 : vector<64x128xf32>
    %cst_63 = arith.constant dense<0xFF800000> : vector<64xf32>
    %99 = vector.multi_reduction <maximumf>, %98, %cst_63 [1] : vector<64x128xf32> to vector<64xf32>
    %100 = vector.shape_cast %99 : vector<64xf32> to vector<64x1xf32>
    %101 = vector.broadcast %100 : vector<64x1xf32> to vector<64x128xf32>
    %102 = arith.subf %98, %101 : vector<64x128xf32>
    %103 = math.exp %102 : vector<64x128xf32>
    %cst_64 = arith.constant dense<0.000000e+00> : vector<64xf32>
    %104 = vector.multi_reduction <add>, %103, %cst_64 [1] : vector<64x128xf32> to vector<64xf32>
    %105 = vector.shape_cast %104 : vector<64xf32> to vector<64x1xf32>
    %106 = math.log %105 : vector<64x1xf32>
    %107 = vector.broadcast %106 : vector<64x1xf32> to vector<64x128xf32>
    %108 = arith.subf %102, %107 : vector<64x128xf32>
    %109 = vector.shape_cast %108 : vector<64x128xf32> to vector<8x8x128xf32>
    %c0_65 = arith.constant 0 : index
    %c0_66 = arith.constant 0 : index
    %c0_67 = arith.constant 0 : index
    %110 = vector.load %arg8[%c0_65, %c0_66, %c0_67] : memref<8x8x128xf32, #tpu.memory_space<vmem>>, vector<8x8x128xf32>
    tpu.vector_store %arg8[%c0_65, %c0_66, %c0_67], %109 {strides = array<i32>} : memref<8x8x128xf32, #tpu.memory_space<vmem>>, vector<8x8x128xf32>,
    return
  }
  func.func @transform_0(%arg0: i32) -> (i32, i32, i32) {
    %c0_i32 = arith.constant 0 : i32
    %c0_i32_0 = arith.constant 0 : i32
    %c0_i32_1 = arith.constant 0 : i32
    return %c0_i32, %arg0, %c0_i32_0 : i32, i32, i32
  }
  func.func @transform_1(%arg0: i32) -> (i32, i32) {
    %c0_i32 = arith.constant 0 : i32
    %c0_i32_0 = arith.constant 0 : i32
    return %arg0, %c0_i32 : i32, i32
  }
  func.func @transform_2(%arg0: i32) -> (i32, i32) {
    %c0_i32 = arith.constant 0 : i32
    %c0_i32_0 = arith.constant 0 : i32
    %c0_i32_1 = arith.constant 0 : i32
    return %c0_i32, %c0_i32_0 : i32, i32
  }
  func.func @transform_3(%arg0: i32) -> (i32, i32) {
    %c0_i32 = arith.constant 0 : i32
    %c0_i32_0 = arith.constant 0 : i32
    %c0_i32_1 = arith.constant 0 : i32
    return %c0_i32, %c0_i32_0 : i32, i32
  }
  func.func @transform_4(%arg0: i32) -> (i32, i32) {
    %c0_i32 = arith.constant 0 : i32
    %c0_i32_0 = arith.constant 0 : i32
    %c0_i32_1 = arith.constant 0 : i32
    return %c0_i32, %c0_i32_0 : i32, i32
  }
  func.func @transform_5(%arg0: i32) -> (i32, i32) {
    %c0_i32 = arith.constant 0 : i32
    %c0_i32_0 = arith.constant 0 : i32
    %c0_i32_1 = arith.constant 0 : i32
    return %c0_i32, %c0_i32_0 : i32, i32
  }
  func.func @transform_6(%arg0: i32) -> (i32, i32) {
    %c0_i32 = arith.constant 0 : i32
    %c0_i32_0 = arith.constant 0 : i32
    %c0_i32_1 = arith.constant 0 : i32
    return %c0_i32, %c0_i32_0 : i32, i32
  }
  func.func @transform_7(%arg0: i32) -> (i32, i32, i32) {
    %c0_i32 = arith.constant 0 : i32
    %c0_i32_0 = arith.constant 0 : i32
    %c0_i32_1 = arith.constant 0 : i32
    return %c0_i32, %arg0, %c0_i32_0 : i32, i32, i32
  }
  func.func @transform_8(%arg0: i32) -> (i32, i32) {
    %c0_i32 = arith.constant 0 : i32
    %c0_i32_0 = arith.constant 0 : i32
    return %arg0, %c0_i32 : i32, i32
  }
}

</mosaic_0001>

<llo_original>
// kernel: rnn_forward.1
$region0: #{rnn_forward.1}
  #allocation0 [shape = 'u32[]', space=smem, size = 0x4, offset = 0x4, fixed_abs, tag = 'smem constant byte address 0x4 - core index']
  #allocation1 [shape = 'u32[72,128]{1,0:T(1,128)}', space=vmem, size = 0x9000, scoped, tag = 'internal scratch']
  #allocation2 [shape = 'f32[8,8,32]{2,1,0:T(8,128)}', space=vmem, size = 0x8000, scoped, tag = 'scratch operand']
  %s0 = inlined_call_operand.vmem [shape: f32[8,8,16], index: 0, kind: input, shape index: {}]
  %s1 = inlined_call_operand.vmem [shape: f32[8,32], index: 1, kind: input, shape index: {}]
  %s2 = inlined_call_operand.vmem [shape: f32[16,32], index: 2, kind: input, shape index: {}]
  %s3 = inlined_call_operand.vmem [shape: f32[32,32], index: 3, kind: input, shape index: {}]
  %s4 = inlined_call_operand.vmem [shape: f32[1,32], index: 4, kind: input, shape index: {}]
  %s5 = inlined_call_operand.vmem [shape: f32[32,128], index: 5, kind: input, shape index: {}]
  %s6 = inlined_call_operand.vmem [shape: f32[1,128], index: 6, kind: input, shape index: {}]
  %s7 = inlined_call_operand.vmem [shape: f32[8,8,128], index: 7, kind: output, shape index: {0}]
  %s8 = inlined_call_operand.vmem [shape: f32[8,32], index: 8, kind: output, shape index: {1}]
  %9 = xla_tuple %s7, %s8
  %s10 = sld [smem:[#allocation0]]
  $region46: #{rnn_forward.1} parent=0
    _
  %s12 = ssub.s32 1, %s10
  %s13 = scalar_select 0, %s12, %s10
  // Predicated region
  $region2: #{rnn_forward.1} parent=0 // pred_check
    _
  $region3: #{rnn_forward.1} parent=0 // pred_check_branch
    %15 = sbr.rel (0) target = $region5
  $region4: #{rnn_forward.1} parent=0 // pred_region
    _
  $region5: #{rnn_forward.1} parent=0 // pred_fallthru
    _
  // Predicated region
  $region6: #{rnn_forward.1} parent=0 // pred_check
    _
  $region7: #{rnn_forward.1} parent=0 // pred_check_branch
    %17 = sbr.rel (0) target = $region9
  $region8: #{rnn_forward.1} parent=0 // pred_region
    _
  $region9: #{rnn_forward.1} parent=0 // pred_fallthru
    _
  // Predicated region
  $region10: #{rnn_forward.1} parent=0 // pred_check
    _
  $region11: #{rnn_forward.1} parent=0 // pred_check_branch
    %19 = sbr.rel (0) target = $region13
  $region12: #{rnn_forward.1} parent=0 // pred_region
    _
  $region13: #{rnn_forward.1} parent=0 // pred_fallthru
    _
  // Predicated region
  $region14: #{rnn_forward.1} parent=0 // pred_check
    _
  $region15: #{rnn_forward.1} parent=0 // pred_check_branch
    %21 = sbr.rel (0) target = $region17
  $region16: #{rnn_forward.1} parent=0 // pred_region
    _
  $region17: #{rnn_forward.1} parent=0 // pred_fallthru
    _
  // Predicated region
  $region18: #{rnn_forward.1} parent=0 // pred_check
    _
  $region19: #{rnn_forward.1} parent=0 // pred_check_branch
    %23 = sbr.rel (0) target = $region21
  $region20: #{rnn_forward.1} parent=0 // pred_region
    _
  $region21: #{rnn_forward.1} parent=0 // pred_fallthru
    _
  // Predicated region
  $region22: #{rnn_forward.1} parent=0 // pred_check
    _
  $region23: #{rnn_forward.1} parent=0 // pred_check_branch
    %25 = sbr.rel (0) target = $region25
  $region24: #{rnn_forward.1} parent=0 // pred_region
    _
  $region25: #{rnn_forward.1} parent=0 // pred_fallthru
    _
  // Predicated region
  $region26: #{rnn_forward.1} parent=0 // pred_check
    _
  $region27: #{rnn_forward.1} parent=0 // pred_check_branch
    %27 = sbr.rel (0) target = $region29
  $region28: #{rnn_forward.1} parent=0 // pred_region
    _
  $region29: #{rnn_forward.1} parent=0 // pred_fallthru
    _
  %v28 = vld [vmem:[%s0] sm:$0xff]
  %v29 = vld [vmem:[%s0 + $0x8] sm:$0xff]
  %v30 = vld [vmem:[%s0 + $0x10] sm:$0xff]
  %v31 = vld [vmem:[%s0 + $0x18] sm:$0xff]
  %v32 = vld [vmem:[%s0 + $0x20] sm:$0xff]
  %v33 = vld [vmem:[%s0 + $0x28] sm:$0xff]
  %v34 = vld [vmem:[%s0 + $0x30] sm:$0xff]
  %v35 = vld [vmem:[%s0 + $0x38] sm:$0xff]
  %v36 = vld [vmem:[%s2] sm:$0xff]
  %v37 = vld [vmem:[%s2 + $0x8] sm:$0xff]
  %v38 = vld [vmem:[%s4] sm:$0x1]
  %v40 = vperm.slane %v38, 0
  %vm42 = vcmask 130048
  %v44 = vsel %vm42, %v28, 0
  %v47 = vsel %vm42, %v29, 0
  %v50 = vsel %vm42, %v30, 0
  %v53 = vsel %vm42, %v31, 0
  %v56 = vsel %vm42, %v32, 0
  %v59 = vsel %vm42, %v33, 0
  %v62 = vsel %vm42, %v34, 0
  %v65 = vsel %vm42, %v35, 0
  %67 = vmatpush.msra.mxu0 0.0
  %68 = vmatpush.msra.mxu0 0.0
  %69 = vmatpush.msra.mxu0 0.0
  %70 = vmatpush.msra.mxu0 0.0
  %71 = vmatpush.msra.mxu0 0.0
  %72 = vmatpush.msra.mxu0 0.0
  %73 = vmatpush.msra.mxu0 0.0
  %74 = vmatpush.msra.mxu0 0.0
  %75 = vmatpush.msra.mxu0 0.0
  %76 = vmatpush.msra.mxu0 0.0
  %77 = vmatpush.msra.mxu0 0.0
  %78 = vmatpush.msra.mxu0 0.0
  %79 = vmatpush.msra.mxu0 0.0
  %80 = vmatpush.msra.mxu0 0.0
  %81 = vmatpush.msra.mxu0 %v37
  %82 = vmatpush.msra.mxu0 %v36
  %83 = vmatmul.f32.gmra.mxu0 %v44
  %v84 = vpop.f32.mrf.mxu0
  %v85 = vadd.f32 %v40, %v84
  %86 = vmatmul.f32.gmra.mxu0 %v47
  %v87 = vpop.f32.mrf.mxu0
  %v88 = vadd.f32 %v40, %v87
  %89 = vmatmul.f32.gmra.mxu0 %v50
  %v90 = vpop.f32.mrf.mxu0
  %v91 = vadd.f32 %v40, %v90
  %92 = vmatmul.f32.gmra.mxu0 %v53
  %v93 = vpop.f32.mrf.mxu0
  %v94 = vadd.f32 %v40, %v93
  %95 = vmatmul.f32.gmra.mxu0 %v56
  %v96 = vpop.f32.mrf.mxu0
  %v97 = vadd.f32 %v40, %v96
  %98 = vmatmul.f32.gmra.mxu0 %v59
  %v99 = vpop.f32.mrf.mxu0
  %v100 = vadd.f32 %v40, %v99
  %101 = vmatmul.f32.gmra.mxu0 %v62
  %v102 = vpop.f32.mrf.mxu0
  %v103 = vadd.f32 %v40, %v102
  %104 = vmatmul.f32.gmra.mxu0 %v65
  %v105 = vpop.f32.mrf.mxu0
  %v106 = vadd.f32 %v40, %v105
  %107 = vdwg.mxu0
  %vm108 = vcmask 261120
  %109 = vst.msk [vmem:[#allocation2] sm:$0xff] %vm108, %v85
  %110 = vst.msk [vmem:[#allocation2 + $0x8] sm:$0xff] %vm108, %v88
  %111 = vst.msk [vmem:[#allocation2 + $0x10] sm:$0xff] %vm108, %v91
  %112 = vst.msk [vmem:[#allocation2 + $0x18] sm:$0xff] %vm108, %v94
  %113 = vst.msk [vmem:[#allocation2 + $0x20] sm:$0xff] %vm108, %v97
  %114 = vst.msk [vmem:[#allocation2 + $0x28] sm:$0xff] %vm108, %v100
  %115 = vst.msk [vmem:[#allocation2 + $0x30] sm:$0xff] %vm108, %v103
  %116 = vst.msk [vmem:[#allocation2 + $0x38] sm:$0xff] %vm108, %v106
  %v117 = vld [vmem:[%s3] sm:$0xff]
  %v118 = vld [vmem:[%s3 + $0x8] sm:$0xff]
  %v119 = vld [vmem:[%s3 + $0x10] sm:$0xff]
  %v120 = vld [vmem:[%s3 + $0x18] sm:$0xff]
  %v121 = vld [vmem:[%s1] sm:$0xff]
  %v122 = vld [vmem:[#allocation2] sm:$0xff]
  %v124 = vsel %vm108, %v121, 0
  %126 = vmatpush.msra.mxu0 0.0
  %127 = vmatpush.msra.mxu0 0.0
  %128 = vmatpush.msra.mxu0 0.0
  %129 = vmatpush.msra.mxu0 0.0
  %130 = vmatpush.msra.mxu0 0.0
  %131 = vmatpush.msra.mxu0 0.0
  %132 = vmatpush.msra.mxu0 0.0
  %133 = vmatpush.msra.mxu0 0.0
  %134 = vmatpush.msra.mxu0 0.0
  %135 = vmatpush.msra.mxu0 0.0
  %136 = vmatpush.msra.mxu0 0.0
  %137 = vmatpush.msra.mxu0 0.0
  %138 = vmatpush.msra.mxu0 %v120
  %139 = vmatpush.msra.mxu0 %v119
  %140 = vmatpush.msra.mxu0 %v118
  %141 = vmatpush.msra.mxu0 %v117
  %142 = vmatmul.f32.gmra.mxu0 %v124
  %v143 = vpop.f32.mrf.mxu0
  %v144 = vadd.f32 0.0, %v143
  %145 = vdwg.mxu0
  %v146 = vadd.f32 %v122, %v144
  %v147 = vtanh.pop %v146
  %148 = vst.msk [vmem:[#allocation2] sm:$0xff] %vm108, %v147
  %s149 = scalar_lea.vmem [#allocation2], 8
  %v150 = vld [vmem:[%s149] sm:$0xff]
  %v152 = vsel %vm108, %v147, 0
  %154 = vmatpush.msra.mxu0 0.0
  %155 = vmatpush.msra.mxu0 0.0
  %156 = vmatpush.msra.mxu0 0.0
  %157 = vmatpush.msra.mxu0 0.0
  %158 = vmatpush.msra.mxu0 0.0
  %159 = vmatpush.msra.mxu0 0.0
  %160 = vmatpush.msra.mxu0 0.0
  %161 = vmatpush.msra.mxu0 0.0
  %162 = vmatpush.msra.mxu0 0.0
  %163 = vmatpush.msra.mxu0 0.0
  %164 = vmatpush.msra.mxu0 0.0
  %165 = vmatpush.msra.mxu0 0.0
  %166 = vmatpush.msra.mxu0 %v120
  %167 = vmatpush.msra.mxu0 %v119
  %168 = vmatpush.msra.mxu0 %v118
  %169 = vmatpush.msra.mxu0 %v117
  %170 = vmatmul.f32.gmra.mxu0 %v152
  %v171 = vpop.f32.mrf.mxu0
  %v172 = vadd.f32 0.0, %v171
  %173 = vdwg.mxu0
  %v174 = vadd.f32 %v150, %v172
  %v175 = vtanh.pop %v174
  %176 = vst.msk [vmem:[%s149] sm:$0xff] %vm108, %v175
  %s177 = scalar_lea.vmem [#allocation2], 16
  %v178 = vld [vmem:[%s177] sm:$0xff]
  %v180 = vsel %vm108, %v175, 0
  %182 = vmatpush.msra.mxu0 0.0
  %183 = vmatpush.msra.mxu0 0.0
  %184 = vmatpush.msra.mxu0 0.0
  %185 = vmatpush.msra.mxu0 0.0
  %186 = vmatpush.msra.mxu0 0.0
  %187 = vmatpush.msra.mxu0 0.0
  %188 = vmatpush.msra.mxu0 0.0
  %189 = vmatpush.msra.mxu0 0.0
  %190 = vmatpush.msra.mxu0 0.0
  %191 = vmatpush.msra.mxu0 0.0
  %192 = vmatpush.msra.mxu0 0.0
  %193 = vmatpush.msra.mxu0 0.0
  %194 = vmatpush.msra.mxu0 %v120
  %195 = vmatpush.msra.mxu0 %v119
  %196 = vmatpush.msra.mxu0 %v118
  %197 = vmatpush.msra.mxu0 %v117
  %198 = vmatmul.f32.gmra.mxu0 %v180
  %v199 = vpop.f32.mrf.mxu0
  %v200 = vadd.f32 0.0, %v199
  %201 = vdwg.mxu0
  %v202 = vadd.f32 %v178, %v200
  %v203 = vtanh.pop %v202
  %204 = vst.msk [vmem:[%s177] sm:$0xff] %vm108, %v203
  %s205 = scalar_lea.vmem [#allocation2], 24
  %v206 = vld [vmem:[%s205] sm:$0xff]
  %v208 = vsel %vm108, %v203, 0
  %210 = vmatpush.msra.mxu0 0.0
  %211 = vmatpush.msra.mxu0 0.0
  %212 = vmatpush.msra.mxu0 0.0
  %213 = vmatpush.msra.mxu0 0.0
  %214 = vmatpush.msra.mxu0 0.0
  %215 = vmatpush.msra.mxu0 0.0
  %216 = vmatpush.msra.mxu0 0.0
  %217 = vmatpush.msra.mxu0 0.0
  %218 = vmatpush.msra.mxu0 0.0
  %219 = vmatpush.msra.mxu0 0.0
  %220 = vmatpush.msra.mxu0 0.0
  %221 = vmatpush.msra.mxu0 0.0
  %222 = vmatpush.msra.mxu0 %v120
  %223 = vmatpush.msra.mxu0 %v119
  %224 = vmatpush.msra.mxu0 %v118
  %225 = vmatpush.msra.mxu0 %v117
  %226 = vmatmul.f32.gmra.mxu0 %v208
  %v227 = vpop.f32.mrf.mxu0
  %v228 = vadd.f32 0.0, %v227
  %229 = vdwg.mxu0
  %v230 = vadd.f32 %v206, %v228
  %v231 = vtanh.pop %v230
  %232 = vst.msk [vmem:[%s205] sm:$0xff] %vm108, %v231
  %s233 = scalar_lea.vmem [#allocation2], 32
  %v234 = vld [vmem:[%s233] sm:$0xff]
  %v236 = vsel %vm108, %v231, 0
  %238 = vmatpush.msra.mxu0 0.0
  %239 = vmatpush.msra.mxu0 0.0
  %240 = vmatpush.msra.mxu0 0.0
  %241 = vmatpush.msra.mxu0 0.0
  %242 = vmatpush.msra.mxu0 0.0
  %243 = vmatpush.msra.mxu0 0.0
  %244 = vmatpush.msra.mxu0 0.0
  %245 = vmatpush.msra.mxu0 0.0
  %246 = vmatpush.msra.mxu0 0.0
  %247 = vmatpush.msra.mxu0 0.0
  %248 = vmatpush.msra.mxu0 0.0
  %249 = vmatpush.msra.mxu0 0.0
  %250 = vmatpush.msra.mxu0 %v120
  %251 = vmatpush.msra.mxu0 %v119
  %252 = vmatpush.msra.mxu0 %v118
  %253 = vmatpush.msra.mxu0 %v117
  %254 = vmatmul.f32.gmra.mxu0 %v236
  %v255 = vpop.f32.mrf.mxu0
  %v256 = vadd.f32 0.0, %v255
  %257 = vdwg.mxu0
  %v258 = vadd.f32 %v234, %v256
  %v259 = vtanh.pop %v258
  %260 = vst.msk [vmem:[%s233] sm:$0xff] %vm108, %v259
  %s261 = scalar_lea.vmem [#allocation2], 40
  %v262 = vld [vmem:[%s261] sm:$0xff]
  %v264 = vsel %vm108, %v259, 0
  %266 = vmatpush.msra.mxu0 0.0
  %267 = vmatpush.msra.mxu0 0.0
  %268 = vmatpush.msra.mxu0 0.0
  %269 = vmatpush.msra.mxu0 0.0
  %270 = vmatpush.msra.mxu0 0.0
  %271 = vmatpush.msra.mxu0 0.0
  %272 = vmatpush.msra.mxu0 0.0
  %273 = vmatpush.msra.mxu0 0.0
  %274 = vmatpush.msra.mxu0 0.0
  %275 = vmatpush.msra.mxu0 0.0
  %276 = vmatpush.msra.mxu0 0.0
  %277 = vmatpush.msra.mxu0 0.0
  %278 = vmatpush.msra.mxu0 %v120
  %279 = vmatpush.msra.mxu0 %v119
  %280 = vmatpush.msra.mxu0 %v118
  %281 = vmatpush.msra.mxu0 %v117
  %282 = vmatmul.f32.gmra.mxu0 %v264
  %v283 = vpop.f32.mrf.mxu0
  %v284 = vadd.f32 0.0, %v283
  %285 = vdwg.mxu0
  %v286 = vadd.f32 %v262, %v284
  %v287 = vtanh.pop %v286
  %288 = vst.msk [vmem:[%s261] sm:$0xff] %vm108, %v287
  %s289 = scalar_lea.vmem [#allocation2], 48
  %v290 = vld [vmem:[%s289] sm:$0xff]
  %v292 = vsel %vm108, %v287, 0
  %294 = vmatpush.msra.mxu0 0.0
  %295 = vmatpush.msra.mxu0 0.0
  %296 = vmatpush.msra.mxu0 0.0
  %297 = vmatpush.msra.mxu0 0.0
  %298 = vmatpush.msra.mxu0 0.0
  %299 = vmatpush.msra.mxu0 0.0
  %300 = vmatpush.msra.mxu0 0.0
  %301 = vmatpush.msra.mxu0 0.0
  %302 = vmatpush.msra.mxu0 0.0
  %303 = vmatpush.msra.mxu0 0.0
  %304 = vmatpush.msra.mxu0 0.0
  %305 = vmatpush.msra.mxu0 0.0
  %306 = vmatpush.msra.mxu0 %v120
  %307 = vmatpush.msra.mxu0 %v119
  %308 = vmatpush.msra.mxu0 %v118
  %309 = vmatpush.msra.mxu0 %v117
  %310 = vmatmul.f32.gmra.mxu0 %v292
  %v311 = vpop.f32.mrf.mxu0
  %v312 = vadd.f32 0.0, %v311
  %313 = vdwg.mxu0
  %v314 = vadd.f32 %v290, %v312
  %v315 = vtanh.pop %v314
  %316 = vst.msk [vmem:[%s289] sm:$0xff] %vm108, %v315
  %s317 = scalar_lea.vmem [#allocation2], 56
  %v318 = vld [vmem:[%s317] sm:$0xff]
  %v320 = vsel %vm108, %v315, 0
  %322 = vmatpush.msra.mxu0 0.0
  %323 = vmatpush.msra.mxu0 0.0
  %324 = vmatpush.msra.mxu0 0.0
  %325 = vmatpush.msra.mxu0 0.0
  %326 = vmatpush.msra.mxu0 0.0
  %327 = vmatpush.msra.mxu0 0.0
  %328 = vmatpush.msra.mxu0 0.0
  %329 = vmatpush.msra.mxu0 0.0
  %330 = vmatpush.msra.mxu0 0.0
  %331 = vmatpush.msra.mxu0 0.0
  %332 = vmatpush.msra.mxu0 0.0
  %333 = vmatpush.msra.mxu0 0.0
  %334 = vmatpush.msra.mxu0 %v120
  %335 = vmatpush.msra.mxu0 %v119
  %336 = vmatpush.msra.mxu0 %v118
  %337 = vmatpush.msra.mxu0 %v117
  %338 = vmatmul.f32.gmra.mxu0 %v320
  %v339 = vpop.f32.mrf.mxu0
  %v340 = vadd.f32 0.0, %v339
  %341 = vdwg.mxu0
  %v342 = vadd.f32 %v318, %v340
  %v343 = vtanh.pop %v342
  %344 = vst.msk [vmem:[%s317] sm:$0xff] %vm108, %v343
  %345 = vst.msk [vmem:[%s8] sm:$0xff] %vm108, %v343
  %v346 = vld [vmem:[#allocation2] sm:$0xff]
  %v347 = vld [vmem:[#allocation2 + $0x8] sm:$0xff]
  %v348 = vld [vmem:[#allocation2 + $0x10] sm:$0xff]
  %v349 = vld [vmem:[#allocation2 + $0x18] sm:$0xff]
  %v350 = vld [vmem:[#allocation2 + $0x20] sm:$0xff]
  %v351 = vld [vmem:[#allocation2 + $0x28] sm:$0xff]
  %v352 = vld [vmem:[#allocation2 + $0x30] sm:$0xff]
  %v353 = vld [vmem:[#allocation2 + $0x38] sm:$0xff]
  %v354 = vld [vmem:[%s5] sm:$0xff]
  %v355 = vld [vmem:[%s5 + $0x8] sm:$0xff]
  %v356 = vld [vmem:[%s5 + $0x10] sm:$0xff]
  %v357 = vld [vmem:[%s5 + $0x18] sm:$0xff]
  %v358 = vld [vmem:[%s6] sm:$0x1]
  %v360 = vperm.slane %v358, 0
  %v363 = vsel %vm108, %v346, 0
  %v366 = vsel %vm108, %v347, 0
  %v369 = vsel %vm108, %v348, 0
  %v372 = vsel %vm108, %v349, 0
  %v375 = vsel %vm108, %v350, 0
  %v378 = vsel %vm108, %v351, 0
  %v381 = vsel %vm108, %v352, 0
  %v384 = vsel %vm108, %v353, 0
  %386 = vmatpush.msra.mxu0 0.0
  %387 = vmatpush.msra.mxu0 0.0
  %388 = vmatpush.msra.mxu0 0.0
  %389 = vmatpush.msra.mxu0 0.0
  %390 = vmatpush.msra.mxu0 0.0
  %391 = vmatpush.msra.mxu0 0.0
  %392 = vmatpush.msra.mxu0 0.0
  %393 = vmatpush.msra.mxu0 0.0
  %394 = vmatpush.msra.mxu0 0.0
  %395 = vmatpush.msra.mxu0 0.0
  %396 = vmatpush.msra.mxu0 0.0
  %397 = vmatpush.msra.mxu0 0.0
  %398 = vmatpush.msra.mxu0 %v357
  %399 = vmatpush.msra.mxu0 %v356
  %400 = vmatpush.msra.mxu0 %v355
  %401 = vmatpush.msra.mxu0 %v354
  %402 = vmatmul.f32.gmra.mxu0 %v363
  %v403 = vpop.f32.mrf.mxu0
  %v404 = vadd.f32 %v360, %v403
  %405 = vmatmul.f32.gmra.mxu0 %v366
  %v406 = vpop.f32.mrf.mxu0
  %v407 = vadd.f32 %v360, %v406
  %408 = vmatmul.f32.gmra.mxu0 %v369
  %v409 = vpop.f32.mrf.mxu0
  %v410 = vadd.f32 %v360, %v409
  %411 = vmatmul.f32.gmra.mxu0 %v372
  %v412 = vpop.f32.mrf.mxu0
  %v413 = vadd.f32 %v360, %v412
  %414 = vmatmul.f32.gmra.mxu0 %v375
  %v415 = vpop.f32.mrf.mxu0
  %v416 = vadd.f32 %v360, %v415
  %417 = vmatmul.f32.gmra.mxu0 %v378
  %v418 = vpop.f32.mrf.mxu0
  %v419 = vadd.f32 %v360, %v418
  %420 = vmatmul.f32.gmra.mxu0 %v381
  %v421 = vpop.f32.mrf.mxu0
  %v422 = vadd.f32 %v360, %v421
  %423 = vmatmul.f32.gmra.mxu0 %v384
  %v424 = vpop.f32.mrf.mxu0
  %v425 = vadd.f32 %v360, %v424
  %426 = vdwg.mxu0
  %427 = vmax.xlane.f32.xlu0 %v404
  %v428 = vpop.xlane.xlu0 %427
  %429 = vmax.xlane.f32.xlu0 %v407
  %v430 = vpop.xlane.xlu0 %429
  %431 = vmax.xlane.f32.xlu0 %v410
  %v432 = vpop.xlane.xlu0 %431
  %433 = vmax.xlane.f32.xlu0 %v413
  %v434 = vpop.xlane.xlu0 %433
  %435 = vmax.xlane.f32.xlu0 %v416
  %v436 = vpop.xlane.xlu0 %435
  %437 = vmax.xlane.f32.xlu0 %v419
  %v438 = vpop.xlane.xlu0 %437
  %439 = vmax.xlane.f32.xlu0 %v422
  %v440 = vpop.xlane.xlu0 %439
  %441 = vmax.xlane.f32.xlu0 %v425
  %v442 = vpop.xlane.xlu0 %441
  %v443 = vsub.f32 %v404, %v428
  %v444 = vsub.f32 %v407, %v430
  %v445 = vsub.f32 %v410, %v432
  %v446 = vsub.f32 %v413, %v434
  %v447 = vsub.f32 %v416, %v436
  %v448 = vsub.f32 %v419, %v438
  %v449 = vsub.f32 %v422, %v440
  %v450 = vsub.f32 %v425, %v442
  %v451 = vmul.f32 %v443, 1.442695
  %v452 = vpow.pop %v451
  %v453 = vmul.f32 %v444, 1.442695
  %v454 = vpow.pop %v453
  %v455 = vmul.f32 %v445, 1.442695
  %v456 = vpow.pop %v455
  %v457 = vmul.f32 %v446, 1.442695
  %v458 = vpow.pop %v457
  %v459 = vmul.f32 %v447, 1.442695
  %v460 = vpow.pop %v459
  %v461 = vmul.f32 %v448, 1.442695
  %v462 = vpow.pop %v461
  %v463 = vmul.f32 %v449, 1.442695
  %v464 = vpow.pop %v463
  %v465 = vmul.f32 %v450, 1.442695
  %v466 = vpow.pop %v465
  %467 = vadd.xlane.f32.xlu0 %v452
  %v468 = vpop.xlane.xlu0 %467
  %469 = vadd.xlane.f32.xlu0 %v454
  %v470 = vpop.xlane.xlu0 %469
  %471 = vadd.xlane.f32.xlu0 %v456
  %v472 = vpop.xlane.xlu0 %471
  %473 = vadd.xlane.f32.xlu0 %v458
  %v474 = vpop.xlane.xlu0 %473
  %475 = vadd.xlane.f32.xlu0 %v460
  %v476 = vpop.xlane.xlu0 %475
  %477 = vadd.xlane.f32.xlu0 %v462
  %v478 = vpop.xlane.xlu0 %477
  %479 = vadd.xlane.f32.xlu0 %v464
  %v480 = vpop.xlane.xlu0 %479
  %481 = vadd.xlane.f32.xlu0 %v466
  %v482 = vpop.xlane.xlu0 %481
  %v483 = vlog2.pop %v468
  %v484 = vmul.f32 %v483, 0.6931472
  %v485 = vlog2.pop %v470
  %v486 = vmul.f32 %v485, 0.6931472
  %v487 = vlog2.pop %v472
  %v488 = vmul.f32 %v487, 0.6931472
  %v489 = vlog2.pop %v474
  %v490 = vmul.f32 %v489, 0.6931472
  %v491 = vlog2.pop %v476
  %v492 = vmul.f32 %v491, 0.6931472
  %v493 = vlog2.pop %v478
  %v494 = vmul.f32 %v493, 0.6931472
  %v495 = vlog2.pop %v480
  %v496 = vmul.f32 %v495, 0.6931472
  %v497 = vlog2.pop %v482
  %v498 = vmul.f32 %v497, 0.6931472
  %v499 = vsub.f32 %v443, %v484
  %v500 = vsub.f32 %v444, %v486
  %v501 = vsub.f32 %v445, %v488
  %v502 = vsub.f32 %v446, %v490
  %v503 = vsub.f32 %v447, %v492
  %v504 = vsub.f32 %v448, %v494
  %v505 = vsub.f32 %v449, %v496
  %v506 = vsub.f32 %v450, %v498
  %507 = vst [vmem:[%s7] sm:$0xff] %v499
  %508 = vst [vmem:[%s7 + $0x8] sm:$0xff] %v500
  %509 = vst [vmem:[%s7 + $0x10] sm:$0xff] %v501
  %510 = vst [vmem:[%s7 + $0x18] sm:$0xff] %v502
  %511 = vst [vmem:[%s7 + $0x20] sm:$0xff] %v503
  %512 = vst [vmem:[%s7 + $0x28] sm:$0xff] %v504
  %513 = vst [vmem:[%s7 + $0x30] sm:$0xff] %v505
  %514 = vst [vmem:[%s7 + $0x38] sm:$0xff] %v506
  // Predicated region
  $region30: #{rnn_forward.1} parent=0 // pred_check
    _
  $region31: #{rnn_forward.1} parent=0 // pred_check_branch
    %516 = sbr.rel (0) target = $region33
  $region32: #{rnn_forward.1} parent=0 // pred_region
    _
  $region33: #{rnn_forward.1} parent=0 // pred_fallthru
    _
  // Predicated region
  $region34: #{rnn_forward.1} parent=0 // pred_check
    _
  $region35: #{rnn_forward.1} parent=0 // pred_check_branch
    %518 = sbr.rel (0) target = $region37
  $region36: #{rnn_forward.1} parent=0 // pred_region
    _
  $region37: #{rnn_forward.1} parent=0 // pred_fallthru
    _
  // Predicated region
  $region38: #{rnn_forward.1} parent=0 // pred_check
    _
  $region39: #{rnn_forward.1} parent=0 // pred_check_branch
    %520 = sbr.rel (0) target = $region41
  $region40: #{rnn_forward.1} parent=0 // pred_region
    _
  $region41: #{rnn_forward.1} parent=0 // pred_fallthru
    _
  // Predicated region
  $region42: #{rnn_forward.1} parent=0 // pred_check
    _
  $region43: #{rnn_forward.1} parent=0 // pred_check_branch
    %522 = sbr.rel (0) target = $region45
  $region44: #{rnn_forward.1} parent=0 // pred_region
    _
  $region45: #{rnn_forward.1} parent=0 // pred_fallthru
    _

</llo_original>
